<compile_context>
chip_gen: v5e
topology: v5e:2x2
jax: 0.10.0
libtpu: 0.0.40
codegen_flags: <defaults>
</compile_context>

<pallas_src>
import functools

import jax
import jax.numpy as jnp
from jax.experimental import pallas as pl
from jax.experimental.pallas import tpu as pltpu

LANE = 128        # TPU lane width
SUBLANE = 8       # TPU sublane width
MAX_ROW_TILE = 1024


def _round_up(n, m):
    return ((n + m - 1) // m) * m


def _mlp_ram_kernel(x_ref, w1_ref, b1_ref, w2_ref, b2_ref, o_ref):
    # x_ref : (TB, d_in)        -- d_in tiny (e.g. 2)
    # w1_ref: (d_in, Hp)        -- Hp = hidden padded to 128 lanes
    # b1_ref: (1, Hp)
    # w2_ref: (Hp, Np)          -- Np = output padded to 128 lanes
    # b2_ref: (1, Np)
    # o_ref : (TB, num_classes) -- unpadded, lane-masked output tile
    x = x_ref[...]
    w1 = w1_ref[...]
    d_in = x.shape[1]

    # ---- Layer 1 ----
    if d_in <= 8:
        # Tiny K: explicit VPU FMAs avoid an MXU push for a <1%-util matmul.
        h = jnp.broadcast_to(b1_ref[...], (x.shape[0], w1.shape[1]))
        for k in range(d_in):                      # static trip count
            h = h + x[:, k:k + 1] * w1[k:k + 1, :]
    else:
        # Larger flattened inputs: hand it to the MXU instead.
        h = jnp.dot(x, w1, preferred_element_type=jnp.float32) + b1_ref[...]
    h = jax.nn.sigmoid(h)

    # ---- Layer 2 on the MXU: (TB,128) @ (128,128), f32 accumulation. ----
    y = jnp.dot(h, w2_ref[...], preferred_element_type=jnp.float32)
    y = y + b2_ref[...]

    # Keep only the real output columns, then activate and store directly
    # into the (TB, num_classes) block -- no padded HBM writeback and no
    # post-kernel slice.  The narrow last dim becomes a masked vst; the
    # store slot is nowhere near saturated here.
    n_out = o_ref.shape[1]
    o_ref[...] = jnp.tanh(y[:, :n_out]) * 2.0 + 0.5


@functools.partial(jax.jit, static_argnames=("num_classes",))
def mlp_ram_forward(x, w1p, b1p, w2p, b2p, *, num_classes):
    """x: (B, ...) flattened to (B, d_in); params are lane-padded.

    Returns (B, num_classes) float32.
    """
    B = x.shape[0]
    x2d = x.reshape(B, -1).astype(jnp.float32)  # x.view(B, -1)
    d_in = x2d.shape[1]
    hp = w1p.shape[1]   # padded hidden (multiple of 128)
    np_ = w2p.shape[1]  # padded output (multiple of 128)

    # Row tile: multiple of 8 sublanes.  Aim for >=2 grid steps so both v7x
    # TensorCores get work under dimension_semantics=("parallel",); cap at
    # MAX_ROW_TILE to amortize the ~0.35us per-grid-step overhead (tiles are
    # only a few MiB, far under any generation's VMEM).
    tb = min(MAX_ROW_TILE, _round_up(pl.cdiv(B, 2), SUBLANE))
    tb = max(tb, SUBLANE)
    grid = (pl.cdiv(B, tb),)
    # NOTE: when B % tb != 0 the last grid step computes on out-of-range rows
    # of the x block; results stay correct because Pallas masks the
    # partial-block writeback -- do not add any cross-row reduction here.

    cost = pl.CostEstimate(
        flops=2 * B * hp * np_ + 2 * B * d_in * hp + 4 * B * hp,
        transcendentals=B * (hp + np_),
        bytes_accessed=4 * (B * (d_in + num_classes)
                            + d_in * hp + hp + hp * np_ + np_),
    )

    resident = pl.Buffered(1)  # constant-index blocks: no double buffer
    out = pl.pallas_call(
        _mlp_ram_kernel,
        out_shape=jax.ShapeDtypeStruct((B, num_classes), jnp.float32),
        grid=grid,
        in_specs=[
            pl.BlockSpec((tb, d_in), lambda i: (i, 0)),    # row-tiled acts
            pl.BlockSpec((d_in, hp), lambda i: (0, 0), pipeline_mode=resident),
            pl.BlockSpec((1, hp), lambda i: (0, 0), pipeline_mode=resident),
            pl.BlockSpec((hp, np_), lambda i: (0, 0), pipeline_mode=resident),
            pl.BlockSpec((1, np_), lambda i: (0, 0), pipeline_mode=resident),
        ],
        # Output last dim equals the full array dim (num_classes), so the
        # (8,128) divisibility rule is satisfied without padding the output.
        out_specs=pl.BlockSpec((tb, num_classes), lambda i: (i, 0)),
        compiler_params=pltpu.CompilerParams(
            dimension_semantics=("parallel",)),
        cost_estimate=cost,
    )(x2d, w1p, b1p, w2p, b2p)
    return out


def init_params(key, input_size=2, num_classes=11):
    """Mimics nn.Linear's U(-1/sqrt(fan_in), +1/sqrt(fan_in)) init.

    Weights are (in_features, out_features) -- transposed vs. PyTorch.
    """
    hidden = num_classes * 2
    k1, k2, k3, k4 = jax.random.split(key, 4)

    bound1 = 1.0 / jnp.sqrt(jnp.float32(input_size))
    w1 = jax.random.uniform(k1, (input_size, hidden), jnp.float32,
                            minval=-bound1, maxval=bound1)
    b1 = jax.random.uniform(k2, (1, hidden), jnp.float32,
                            minval=-bound1, maxval=bound1)

    bound2 = 1.0 / jnp.sqrt(jnp.float32(hidden))
    w2 = jax.random.uniform(k3, (hidden, num_classes), jnp.float32,
                            minval=-bound2, maxval=bound2)
    b2 = jax.random.uniform(k4, (1, num_classes), jnp.float32,
                            minval=-bound2, maxval=bound2)
    return w1, b1, w2, b2


def pad_params(w1, b1, w2, b2):
    """One-time zero-padding of feature dims to the 128-lane width.

    Zero padding keeps the math exact: padded hidden units get sigmoid(0),
    but their w2 rows are zero so they contribute nothing; padded output
    columns are dropped inside the kernel before the final store.
    """
    d_in, hidden = w1.shape
    n_out = w2.shape[1]
    hp = _round_up(hidden, LANE)
    np_ = _round_up(n_out, LANE)

    w1p = jnp.zeros((d_in, hp), jnp.float32).at[:, :hidden].set(w1)
    b1p = jnp.zeros((1, hp), jnp.float32).at[:, :hidden].set(b1)
    w2p = jnp.zeros((hp, np_), jnp.float32).at[:hidden, :n_out].set(w2)
    b2p = jnp.zeros((1, np_), jnp.float32).at[:, :n_out].set(b2)
    return w1p, b1p, w2p, b2p


def reference_forward(x, w1, b1, w2, b2):
    """Pure-JAX reference (unpadded params) for correctness checking."""
    x2d = x.reshape(x.shape[0], -1).astype(jnp.float32)
    h = jax.nn.sigmoid(x2d @ w1 + b1)
    return jnp.tanh(h @ w2 + b2) * 2.0 + 0.5


if __name__ == "__main__":
    key = jax.random.PRNGKey(0)
    kx, kp = jax.random.split(key)

    input_size = 2
    num_classes = 11
    batch = 8

    # Module's forward flattens with x.view(B, -1); input is (B, input_size).
    x = jax.random.normal(kx, (batch, input_size), jnp.float32)
    w1, b1, w2, b2 = init_params(kp, input_size=input_size,
                                 num_classes=num_classes)
    w1p, b1p, w2p, b2p = pad_params(w1, b1, w2, b2)   # done once, at init

    out = mlp_ram_forward(x, w1p, b1p, w2p, b2p, num_classes=num_classes)
    out = jax.block_until_ready(out)

    ref = reference_forward(x, w1, b1, w2, b2)
    assert out.shape == (batch, num_classes), out.shape
    assert jnp.allclose(out, ref, atol=1e-5, rtol=1e-5), (
        f"max abs err {jnp.max(jnp.abs(out - ref))}")

    # TODO(synk): if profiling at large B shows EUP-bound (sigmoid/tanh over
    # 128 padded lanes), consider the transposed features-on-sublanes layout
    # from the review; deferred since it changes the output layout to (C, B).
    print("KERNEL_OK")
</pallas_src>

<mosaic_0001>
module attributes {stable_mosaic.version = 11 : i64} {
  func.func @_mlp_ram_kernel(%arg0: i32, %arg1: memref<8x2xf32, #tpu.memory_space<vmem>>, %arg2: memref<2x128xf32, #tpu.memory_space<vmem>>, %arg3: memref<1x128xf32, #tpu.memory_space<vmem>>, %arg4: memref<128x128xf32, #tpu.memory_space<vmem>>, %arg5: memref<1x128xf32, #tpu.memory_space<vmem>>, %arg6: memref<8x11xf32, #tpu.memory_space<vmem>>) attributes {dimension_semantics = [#tpu.dimension_semantics<parallel>], iteration_bounds = array<i64: 1>, scalar_prefetch = 0 : i64, scratch_operands = 0 : i64, tpu.core_type = #tpu.core_type<tc>, window_params = [{transform_indices = @transform_0, window_bounds = array<i64: 8, 2>}, {pipeline_mode = #tpu.pipeline_mode<synchronous>, transform_indices = @transform_1, window_bounds = array<i64: 2, 128>}, {pipeline_mode = #tpu.pipeline_mode<synchronous>, transform_indices = @transform_2, window_bounds = array<i64: 1, 128>}, {pipeline_mode = #tpu.pipeline_mode<synchronous>, transform_indices = @transform_3, window_bounds = array<i64: 128, 128>}, {pipeline_mode = #tpu.pipeline_mode<synchronous>, transform_indices = @transform_4, window_bounds = array<i64: 1, 128>}, {transform_indices = @transform_5, window_bounds = array<i64: 8, 11>}]} {
    %c0 = arith.constant 0 : index
    %c0_0 = arith.constant 0 : index
    %0 = vector.load %arg1[%c0, %c0_0] : memref<8x2xf32, #tpu.memory_space<vmem>>, vector<8x2xf32>
    %c0_1 = arith.constant 0 : index
    %c0_2 = arith.constant 0 : index
    %1 = vector.load %arg2[%c0_1, %c0_2] : memref<2x128xf32, #tpu.memory_space<vmem>>, vector<2x128xf32>
    %c0_3 = arith.constant 0 : index
    %c0_4 = arith.constant 0 : index
    %2 = vector.load %arg3[%c0_3, %c0_4] : memref<1x128xf32, #tpu.memory_space<vmem>>, vector<1x128xf32>
    %3 = vector.shape_cast %2 : vector<1x128xf32> to vector<1x128xf32>
    %4 = vector.broadcast %3 : vector<1x128xf32> to vector<8x128xf32>
    %5 = vector.extract_strided_slice %0 {offsets = [0, 0], sizes = [8, 1], strides = [1, 1]} : vector<8x2xf32> to vector<8x1xf32>
    %6 = vector.extract_strided_slice %1 {offsets = [0, 0], sizes = [1, 128], strides = [1, 1]} : vector<2x128xf32> to vector<1x128xf32>
    %7 = vector.broadcast %5 : vector<8x1xf32> to vector<8x128xf32>
    %8 = vector.broadcast %6 : vector<1x128xf32> to vector<8x128xf32>
    %9 = arith.mulf %7, %8 : vector<8x128xf32>
    %10 = arith.addf %4, %9 : vector<8x128xf32>
    %11 = vector.extract_strided_slice %0 {offsets = [0, 1], sizes = [8, 1], strides = [1, 1]} : vector<8x2xf32> to vector<8x1xf32>
    %12 = vector.extract_strided_slice %1 {offsets = [1, 0], sizes = [1, 128], strides = [1, 1]} : vector<2x128xf32> to vector<1x128xf32>
    %13 = vector.broadcast %11 : vector<8x1xf32> to vector<8x128xf32>
    %14 = vector.broadcast %12 : vector<1x128xf32> to vector<8x128xf32>
    %15 = arith.mulf %13, %14 : vector<8x128xf32>
    %16 = arith.addf %10, %15 : vector<8x128xf32>
    %17 = arith.negf %16 : vector<8x128xf32>
    %18 = math.exp %17 : vector<8x128xf32>
    %cst = arith.constant 1.000000e+00 : f32
    %19 = vector.broadcast %cst : f32 to vector<8x128xf32>
    %20 = arith.addf %19, %18 : vector<8x128xf32>
    %21 = arith.divf %19, %20 : vector<8x128xf32>
    %c0_5 = arith.constant 0 : index
    %c0_6 = arith.constant 0 : index
    %22 = vector.load %arg4[%c0_5, %c0_6] : memref<128x128xf32, #tpu.memory_space<vmem>>, vector<128x128xf32>
    %cst_7 = arith.constant dense<0.000000e+00> : vector<8x128xf32>
    %23 = tpu.matmul %21, %22, %cst_7 {dimension_numbers = #tpu.dot_dimension_numbers<[1], [0], [0], [1], [0, 0, 1, 1], [], []>} : vector<8x128xf32>, vector<128x128xf32>, vector<8x128xf32> -> vector<8x128xf32>
    %c0_8 = arith.constant 0 : index
    %c0_9 = arith.constant 0 : index
    %24 = vector.load %arg5[%c0_8, %c0_9] : memref<1x128xf32, #tpu.memory_space<vmem>>, vector<1x128xf32>
    %25 = vector.broadcast %24 : vector<1x128xf32> to vector<8x128xf32>
    %26 = arith.addf %23, %25 : vector<8x128xf32>
    %27 = vector.extract_strided_slice %26 {offsets = [0, 0], sizes = [8, 11], strides = [1, 1]} : vector<8x128xf32> to vector<8x11xf32>
    %28 = math.tanh %27 : vector<8x11xf32>
    %cst_10 = arith.constant 2.000000e+00 : f32
    %29 = vector.broadcast %cst_10 : f32 to vector<8x11xf32>
    %30 = arith.mulf %28, %29 : vector<8x11xf32>
    %cst_11 = arith.constant 5.000000e-01 : f32
    %31 = vector.broadcast %cst_11 : f32 to vector<8x11xf32>
    %32 = arith.addf %30, %31 : vector<8x11xf32>
    %c0_12 = arith.constant 0 : index
    %c0_13 = arith.constant 0 : index
    %33 = vector.load %arg6[%c0_12, %c0_13] : memref<8x11xf32, #tpu.memory_space<vmem>>, vector<8x11xf32>
    tpu.vector_store %arg6[%c0_12, %c0_13], %32 {strides = array<i32>} : memref<8x11xf32, #tpu.memory_space<vmem>>, vector<8x11xf32>,
    return
  }
  func.func @transform_0(%arg0: i32) -> (i32, i32) {
    %c0_i32 = arith.constant 0 : i32
    %c0_i32_0 = arith.constant 0 : i32
    return %arg0, %c0_i32 : i32, i32
  }
  func.func @transform_1(%arg0: i32) -> (i32, i32) {
    %c0_i32 = arith.constant 0 : i32
    %c0_i32_0 = arith.constant 0 : i32
    %c0_i32_1 = arith.constant 0 : i32
    return %c0_i32, %c0_i32_0 : i32, i32
  }
  func.func @transform_2(%arg0: i32) -> (i32, i32) {
    %c0_i32 = arith.constant 0 : i32
    %c0_i32_0 = arith.constant 0 : i32
    %c0_i32_1 = arith.constant 0 : i32
    return %c0_i32, %c0_i32_0 : i32, i32
  }
  func.func @transform_3(%arg0: i32) -> (i32, i32) {
    %c0_i32 = arith.constant 0 : i32
    %c0_i32_0 = arith.constant 0 : i32
    %c0_i32_1 = arith.constant 0 : i32
    return %c0_i32, %c0_i32_0 : i32, i32
  }
  func.func @transform_4(%arg0: i32) -> (i32, i32) {
    %c0_i32 = arith.constant 0 : i32
    %c0_i32_0 = arith.constant 0 : i32
    %c0_i32_1 = arith.constant 0 : i32
    return %c0_i32, %c0_i32_0 : i32, i32
  }
  func.func @transform_5(%arg0: i32) -> (i32, i32) {
    %c0_i32 = arith.constant 0 : i32
    %c0_i32_0 = arith.constant 0 : i32
    return %arg0, %c0_i32 : i32, i32
  }
}

</mosaic_0001>

<llo_original>
// kernel: mlp_ram_forward.1
$region0: #{mlp_ram_forward.1}
  #allocation0 [shape = 'u32[]', space=smem, size = 0x4, offset = 0x4, fixed_abs, tag = 'smem constant byte address 0x4 - core index']
  #allocation1 [shape = 'u32[72,128]{1,0:T(1,128)}', space=vmem, size = 0x9000, scoped, tag = 'internal scratch']
  %s0 = inlined_call_operand.vmem [shape: f32[8,2], index: 0, kind: input, shape index: {}]
  %s1 = inlined_call_operand.vmem [shape: f32[2,128], index: 1, kind: input, shape index: {}]
  %s2 = inlined_call_operand.vmem [shape: f32[1,128], index: 2, kind: input, shape index: {}]
  %s3 = inlined_call_operand.hbm [shape: f32[128,128], index: 3, kind: input, shape index: {}]
  %s4 = inlined_call_operand.vmem [shape: f32[1,128], index: 4, kind: input, shape index: {}]
  %s5 = inlined_call_operand.hbm [shape: f32[8,11], index: 5, kind: output, shape index: {}]
  %s6 = sld [smem:[#allocation0]]
  $region34: #{mlp_ram_forward.1} parent=0
    _
  %s8 = ssub.s32 1, %s6
  %s9 = scalar_select 0, %s8, %s6
  $region1: #{mlp_ram_forward.1} parent=0
    #allocation2 [shape = 'u8[65536]{0}', space=vmem, size = 0x10000, scoped, tag = 'input window, operand 3, single buffered']
    #allocation3 [shape = 's32[1]{0}', space=sflag, size = 0x4, scoped, tag = 'scoped memory for mlp_ram_forward.1']
    #allocation4 [shape = 's32[1]{0}', space=sflag, size = 0x4, scoped, tag = 'scoped memory for mlp_ram_forward.1']
    #allocation5 [shape = 'u8[4096]{0}', space=vmem, size = 0x1000, scoped, tag = 'output window, operand 0, single buffered']
    %10 = vsyncpa [#allocation3], 0
    %11 = vsyncpa [#allocation4], 0
    // Predicated region
    $region2: #{mlp_ram_forward.1} parent=1 // pred_check
      _
    $region3: #{mlp_ram_forward.1} parent=1 // pred_check_branch
      %13 = sbr.rel (0) target = $region5
    $region4: #{mlp_ram_forward.1} parent=1 // pred_region
      _
    $region5: #{mlp_ram_forward.1} parent=1 // pred_fallthru
      _
    // Predicated region
    $region6: #{mlp_ram_forward.1} parent=1 // pred_check
      _
    $region7: #{mlp_ram_forward.1} parent=1 // pred_check_branch
      %15 = sbr.rel (0) target = $region9
    $region8: #{mlp_ram_forward.1} parent=1 // pred_region
      _
    $region9: #{mlp_ram_forward.1} parent=1 // pred_fallthru
      _
    // Predicated region
    $region10: #{mlp_ram_forward.1} parent=1 // pred_check
      _
    $region11: #{mlp_ram_forward.1} parent=1 // pred_check_branch
      %17 = sbr.rel (0) target = $region13
    $region12: #{mlp_ram_forward.1} parent=1 // pred_region
      _
    $region13: #{mlp_ram_forward.1} parent=1 // pred_fallthru
      _
    // Predicated region
    $region14: #{mlp_ram_forward.1} parent=1 // pred_check
      _
    $region15: #{mlp_ram_forward.1} parent=1 // pred_check_branch
      %19 = sbr.rel (0) target = $region17
    $region16: #{mlp_ram_forward.1} parent=1 // pred_region
      %21 = vsyncadd [#allocation3], 0
      %s22 = sshll.u32 %s3, 4
      %s23 = int_to_ptr.hbm [resolvable:$true] %s22
      %s24 = sshll.u32 [#allocation2], 4
      %s25 = int_to_ptr.vmem [resolvable:$true] %s24
      %30 = dma.hbm_to_vmem [thread:$0]  %s23, 2048, %s25, [#allocation3], 128, 128, 8
    $region17: #{mlp_ram_forward.1} parent=1 // pred_fallthru
      _
    // Predicated region
    $region18: #{mlp_ram_forward.1} parent=1 // pred_check
      _
    $region19: #{mlp_ram_forward.1} parent=1 // pred_check_branch
      %32 = sbr.rel (0) target = $region21
    $region20: #{mlp_ram_forward.1} parent=1 // pred_region
      _
    $region21: #{mlp_ram_forward.1} parent=1 // pred_fallthru
      _
    // Predicated region
    $region22: #{mlp_ram_forward.1} parent=1 // pred_check
      _
    $region23: #{mlp_ram_forward.1} parent=1 // pred_check_branch
      %34 = sbr.rel (0) target = $region25
    $region24: #{mlp_ram_forward.1} parent=1 // pred_region
      %36 = dma.done [#allocation3], 2048
    $region25: #{mlp_ram_forward.1} parent=1 // pred_fallthru
      _
    %v37 = vld [vmem:[%s0] sm:$0xff]
    %v38 = vld [vmem:[%s1] sm:$0x3]
    %v39 = vld [vmem:[%s2] sm:$0x1]
    %v41 = vperm.slane %v39, 0
    %44 = vset.pattern.permute.xlu0 0
    %45 = vperm.xlu0 %44, %v37
    %v46 = vpop.permute.xlu0 %45
    %v48 = vperm.slane %v38, 0
    %v49 = vmul.f32 %v46, %v48
    %v50 = vadd.f32 %v41, %v49
    %51 = vset.pattern.permute.xlu0 1
    %52 = vperm.xlu0 %51, %v37
    %v53 = vpop.permute.xlu0 %52
    %v55 = vperm.slane %v38, 1
    %v56 = vmul.f32 %v53, %v55
    %v57 = vadd.f32 %v50, %v56
    %v58 = vxor.u32 %v57, 2147483648
    %v59 = vmul.f32 %v58, 1.442695
    %v60 = vpow.pop %v59
    %v61 = vadd.f32 %v60, 1.0
    %v62 = vrcp.pop %v61
    %v63 = vmul.f32 %v61, %v62
    %v64 = vsub.f32 1.0, %v63
    %v65 = vmul.f32 %v62, %v64
    %v66 = vadd.f32 %v62, %v65
    %vm67 = vweird.f32 %v61
    %vm68 = vweird.f32 %v62
    %vm69 = vmor %vm67, %vm68
    %v70 = vsel %vm69, %v62, %v66
    %v71 = vand.u32 2147483647, %v61
    %vm72 = vcmp.eq.f32.partialorder %v71, 8.507059e+37
    %v73 = vand.u32 %v61, 2147483648
    %v74 = vor.u32 1.1754944e-38, %v73
    %v75 = vsel %vm72, %v74, %v70
    %v76 = vmul.f32 1.0, %v75
    %v77 = vld [vmem:[#allocation2] sm:$0xff]
    %v78 = vld [vmem:[#allocation2 + $0x8] sm:$0xff]
    %v79 = vld [vmem:[#allocation2 + $0x10] sm:$0xff]
    %v80 = vld [vmem:[#allocation2 + $0x18] sm:$0xff]
    %v81 = vld [vmem:[#allocation2 + $0x20] sm:$0xff]
    %v82 = vld [vmem:[#allocation2 + $0x28] sm:$0xff]
    %v83 = vld [vmem:[#allocation2 + $0x30] sm:$0xff]
    %v84 = vld [vmem:[#allocation2 + $0x38] sm:$0xff]
    %v85 = vld [vmem:[#allocation2 + $0x40] sm:$0xff]
    %v86 = vld [vmem:[#allocation2 + $0x48] sm:$0xff]
    %v87 = vld [vmem:[#allocation2 + $0x50] sm:$0xff]
    %v88 = vld [vmem:[#allocation2 + $0x58] sm:$0xff]
    %v89 = vld [vmem:[#allocation2 + $0x60] sm:$0xff]
    %v90 = vld [vmem:[#allocation2 + $0x68] sm:$0xff]
    %v91 = vld [vmem:[#allocation2 + $0x70] sm:$0xff]
    %v92 = vld [vmem:[#allocation2 + $0x78] sm:$0xff]
    %v93 = vld [vmem:[%s4] sm:$0x1]
    %v95 = vperm.slane %v93, 0
    %97 = vmatpush.msra.mxu0 %v92
    %98 = vmatpush.msra.mxu0 %v91
    %99 = vmatpush.msra.mxu0 %v90
    %100 = vmatpush.msra.mxu0 %v89
    %101 = vmatpush.msra.mxu0 %v88
    %102 = vmatpush.msra.mxu0 %v87
    %103 = vmatpush.msra.mxu0 %v86
    %104 = vmatpush.msra.mxu0 %v85
    %105 = vmatpush.msra.mxu0 %v84
    %106 = vmatpush.msra.mxu0 %v83
    %107 = vmatpush.msra.mxu0 %v82
    %108 = vmatpush.msra.mxu0 %v81
    %109 = vmatpush.msra.mxu0 %v80
    %110 = vmatpush.msra.mxu0 %v79
    %111 = vmatpush.msra.mxu0 %v78
    %112 = vmatpush.msra.mxu0 %v77
    %113 = vmatmul.f32.gmra.mxu0 %v76
    %v114 = vpop.f32.mrf.mxu0
    %v115 = vadd.f32 %v95, %v114
    %116 = vdwg.mxu0
    %v117 = vtanh.pop %v115
    %v118 = vmul.f32 %v117, 2.0
    %v119 = vadd.f32 %v118, 0.5
    %vm120 = vcmask 89088
    %121 = vst.msk [vmem:[#allocation5] sm:$0xff] %vm120, %v119
    // Predicated region
    $region26: #{mlp_ram_forward.1} parent=1 // pred_check
      _
    $region27: #{mlp_ram_forward.1} parent=1 // pred_check_branch
      %123 = sbr.rel (0) target = $region29
    $region28: #{mlp_ram_forward.1} parent=1 // pred_region
      %125 = vsyncadd [#allocation4], 0
      %s127 = sshll.u32 [#allocation5], 4
      %s128 = int_to_ptr.vmem [resolvable:$true] %s127
      %s129 = sshll.u32 %s5, 4
      %s130 = int_to_ptr.hbm [resolvable:$true] %s129
      %132 = dma.vmem_to_hbm [thread:$0]  %s128, 128, %s130, [#allocation4]
    $region29: #{mlp_ram_forward.1} parent=1 // pred_fallthru
      _
    // Predicated region
    $region30: #{mlp_ram_forward.1} parent=1 // pred_check
      _
    $region31: #{mlp_ram_forward.1} parent=1 // pred_check_branch
      %134 = sbr.rel (0) target = $region33
    $region32: #{mlp_ram_forward.1} parent=1 // pred_region
      %136 = dma.done [#allocation4], 128
    $region33: #{mlp_ram_forward.1} parent=1 // pred_fallthru
      _
    %137 = vsyncpa [#allocation3], 1
    %138 = vsyncpa [#allocation4], 1

</llo_original>
